<compile_context>
chip_gen: v7x
topology: tpu7x:2x2x1
jax: 0.10.0
libtpu: 0.0.40
codegen_flags: <defaults>
</compile_context>

<pallas_src>
import functools

import jax
import jax.numpy as jnp
from jax.experimental import pallas as pl
from jax.experimental.pallas import tpu as pltpu

INPUT_SIZE = 4
HIDDEN_SIZE_ = 3
HIDDEN_SIZE = 8
NUM_CLASSES = 1

LANES = 128
SUBLANES = 8
TILE_QUANTUM = LANES * SUBLANES          # 1024 rows: one full (8,128) vreg / plane

# Offsets into the flat SMEM parameter vector (row-major weights).
_W1 = 0                                   # (3, 4)
_B1 = _W1 + HIDDEN_SIZE_ * INPUT_SIZE     # 12
_W2 = _B1 + HIDDEN_SIZE_                  # 15, (8, 3)
_B2 = _W2 + HIDDEN_SIZE * HIDDEN_SIZE_    # 39
_W3 = _B2 + HIDDEN_SIZE                   # 47, (1, 8)
_B3 = _W3 + HIDDEN_SIZE                   # 55
_NPARAMS = _B3 + NUM_CLASSES              # 56


def mlp_kernel(p_ref, x_ref, o_ref):
    # p_ref: (56,) f32 in SMEM -- all weights & biases, read as scalars.
    # x_ref: (4, 8, L) VMEM block -- feature-major, batch folded on (sublane, lane).
    # o_ref: (8, L) VMEM block.
    x = [x_ref[k] for k in range(INPUT_SIZE)]             # 4 planes, each (8, L)

    # fc1 + ReLU: h1[j] = relu(b1[j] + sum_k w1[j,k] * x[k])   (K=4, unrolled)
    h1 = []
    for j in range(HIDDEN_SIZE_):
        acc = p_ref[_B1 + j] + p_ref[_W1 + j * INPUT_SIZE] * x[0]
        for k in range(1, INPUT_SIZE):
            acc = acc + p_ref[_W1 + j * INPUT_SIZE + k] * x[k]
        h1.append(jnp.maximum(acc, 0.0))

    # fc2_ + ReLU: h2[j] = relu(b2[j] + sum_k w2[j,k] * h1[k])  (K=3)
    h2 = []
    for j in range(HIDDEN_SIZE):
        acc = p_ref[_B2 + j] + p_ref[_W2 + j * HIDDEN_SIZE_] * h1[0]
        for k in range(1, HIDDEN_SIZE_):
            acc = acc + p_ref[_W2 + j * HIDDEN_SIZE_ + k] * h1[k]
        h2.append(jnp.maximum(acc, 0.0))

    # fc2 (output head): out = b3 + sum_k w3[k] * h2[k]          (K=8)
    out = p_ref[_B3] + p_ref[_W3] * h2[0]
    for k in range(1, HIDDEN_SIZE):
        out = out + p_ref[_W3 + k] * h2[k]

    o_ref[...] = out.astype(o_ref.dtype)                   # (8, L) lane-dense store


def pack_params(p):
    """Flatten PyTorch-layout ([out,in]) weights + biases into one (56,) f32 vector."""
    return jnp.concatenate([
        p["w1"].reshape(-1), p["b1"].reshape(-1),
        p["w2"].reshape(-1), p["b2"].reshape(-1),
        p["w3"].reshape(-1), p["b3"].reshape(-1),
    ]).astype(jnp.float32)


@functools.partial(jax.jit, static_argnames=("block_b",))
def net_forward(x, params, *, block_b=65536):
    """x: (B, INPUT_SIZE) f32 (torch layout). Returns (B, NUM_CLASSES) f32."""
    B = x.shape[0]
    p_flat = pack_params(params)

    # Tile sizing: rows per grid step, a multiple of 1024 (8 sublanes x 128
    # lanes) so every feature plane is made of full vregs.  Split the batch
    # evenly across the grid to bound padding waste to < one quantum.
    block_b = max(TILE_QUANTUM, (int(block_b) // TILE_QUANTUM) * TILE_QUANTUM)
    bq = pl.cdiv(B, TILE_QUANTUM)                 # batch size in 1024-row quanta
    nb = pl.cdiv(bq * TILE_QUANTUM, block_b)      # number of grid steps
    if bq >= 2:
        nb = max(nb, 2)                           # keep both v7x TensorCores busy
    tb = pl.cdiv(bq, nb) * TILE_QUANTUM           # rows per grid step
    bp = nb * tb                                  # padded batch
    L = tb // SUBLANES                            # lane extent (multiple of 128)

    # Feature-major, sublane-folded layout: one transpose/reshape pass, padding
    # only the ragged tail (a feature-major (4, B) caller layout would skip it).
    xt = x.T.astype(jnp.float32)                               # (4, B)
    if bp != B:
        xt = jnp.pad(xt, ((0, 0), (0, bp - B)))
    x_r = xt.reshape(INPUT_SIZE, bp // L, L)                   # b -> (b // L, b % L)

    # VMEM budget: double-buffered x block (4,8,L) + out block (8,L), plus
    # ~20 live (8,L) f32 intermediates in the body.  Clamp to [32 MiB, 56 MiB]
    # so the request is valid on v5e / v6e / v7x.
    vmem_needed = (2 * INPUT_SIZE + 2 + 20) * SUBLANES * L * 4
    vmem_limit = min(max(vmem_needed + (8 << 20), 32 << 20), 56 << 20)

    out_r = pl.pallas_call(
        mlp_kernel,
        out_shape=jax.ShapeDtypeStruct((bp // L, L), jnp.float32),
        grid=(nb,),
        in_specs=[
            pl.BlockSpec(memory_space=pltpu.MemorySpace.SMEM),          # params
            pl.BlockSpec((INPUT_SIZE, SUBLANES, L), lambda i: (0, i, 0)),  # x tile
        ],
        out_specs=pl.BlockSpec((SUBLANES, L), lambda i: (i, 0)),
        compiler_params=pltpu.CompilerParams(
            dimension_semantics=("parallel",),      # megacore sharding on v7x
            vmem_limit_bytes=vmem_limit),
    )(p_flat, x_r)

    return out_r.reshape(bp)[:B].reshape(B, NUM_CLASSES)


def init_params(key):
    """Deterministic init, PyTorch nn.Linear conventions ([out, in] weights)."""
    ks = jax.random.split(key, 6)

    def uniform(k, shape, fan_in):
        bound = 1.0 / jnp.sqrt(fan_in)
        return jax.random.uniform(k, shape, jnp.float32, -bound, bound)

    return {
        "w1": uniform(ks[0], (HIDDEN_SIZE_, INPUT_SIZE), INPUT_SIZE),
        "b1": uniform(ks[1], (HIDDEN_SIZE_,), INPUT_SIZE),
        "w2": uniform(ks[2], (HIDDEN_SIZE, HIDDEN_SIZE_), HIDDEN_SIZE_),
        "b2": uniform(ks[3], (HIDDEN_SIZE,), HIDDEN_SIZE_),
        "w3": uniform(ks[4], (NUM_CLASSES, HIDDEN_SIZE), HIDDEN_SIZE),
        "b3": uniform(ks[5], (NUM_CLASSES,), HIDDEN_SIZE),
    }


def reference_forward(x, p):
    h1 = jnp.maximum(x @ p["w1"].T + p["b1"], 0.0)
    h2 = jnp.maximum(h1 @ p["w2"].T + p["b2"], 0.0)
    return h2 @ p["w3"].T + p["b3"]


if __name__ == "__main__":
    key = jax.random.PRNGKey(0)
    k_x, k_p = jax.random.split(key)
    params = init_params(k_p)

    # Multi-tile grid: 2048 rows -> two 1024-row tiles (exercises software
    # pipelining and the "parallel" megacore split on v7x).
    x = jax.random.normal(k_x, (2048, INPUT_SIZE), jnp.float32)
    out = jax.block_until_ready(net_forward(x, params, block_b=1024))
    ref = reference_forward(x, params)
    assert out.shape == (2048, NUM_CLASSES)
    assert jnp.allclose(out, ref, atol=1e-5, rtol=1e-5)

    # Ragged batch exercises the pad-to-quantum path (single-tile grid,
    # default block size).
    x_small = jax.random.normal(k_x, (37, INPUT_SIZE), jnp.float32)
    out_small = jax.block_until_ready(net_forward(x_small, params))
    assert out_small.shape == (37, NUM_CLASSES)
    assert jnp.allclose(out_small, reference_forward(x_small, params),
                        atol=1e-5, rtol=1e-5)

    print("KERNEL_OK")
</pallas_src>

<mosaic_0001>
module attributes {stable_mosaic.version = 11 : i64} {
  func.func @mlp_kernel(%arg0: i32, %arg1: memref<56xf32, #tpu.memory_space<smem>>, %arg2: memref<4x8x128xf32, #tpu.memory_space<vmem>>, %arg3: memref<8x128xf32, #tpu.memory_space<vmem>>) attributes {dimension_semantics = [#tpu.dimension_semantics<parallel>], iteration_bounds = array<i64: 2>, scalar_prefetch = 0 : i64, scratch_operands = 0 : i64, tpu.core_type = #tpu.core_type<tc>, window_params = [{transform_indices = @transform_0, window_bounds = array<i64: 56>}, {transform_indices = @transform_1, window_bounds = array<i64: 4, 8, 128>}, {transform_indices = @transform_2, window_bounds = array<i64: 8, 128>}]} {
    %c0 = arith.constant 0 : index
    %c0_0 = arith.constant 0 : index
    %c0_1 = arith.constant 0 : index
    %0 = vector.load %arg2[%c0, %c0_0, %c0_1] : memref<4x8x128xf32, #tpu.memory_space<vmem>>, vector<1x8x128xf32>
    %1 = vector.shape_cast %0 : vector<1x8x128xf32> to vector<8x128xf32>
    %c1 = arith.constant 1 : index
    %c0_2 = arith.constant 0 : index
    %c0_3 = arith.constant 0 : index
    %2 = vector.load %arg2[%c1, %c0_2, %c0_3] : memref<4x8x128xf32, #tpu.memory_space<vmem>>, vector<1x8x128xf32>
    %3 = vector.shape_cast %2 : vector<1x8x128xf32> to vector<8x128xf32>
    %c2 = arith.constant 2 : index
    %c0_4 = arith.constant 0 : index
    %c0_5 = arith.constant 0 : index
    %4 = vector.load %arg2[%c2, %c0_4, %c0_5] : memref<4x8x128xf32, #tpu.memory_space<vmem>>, vector<1x8x128xf32>
    %5 = vector.shape_cast %4 : vector<1x8x128xf32> to vector<8x128xf32>
    %c3 = arith.constant 3 : index
    %c0_6 = arith.constant 0 : index
    %c0_7 = arith.constant 0 : index
    %6 = vector.load %arg2[%c3, %c0_6, %c0_7] : memref<4x8x128xf32, #tpu.memory_space<vmem>>, vector<1x8x128xf32>
    %7 = vector.shape_cast %6 : vector<1x8x128xf32> to vector<8x128xf32>
    %c12 = arith.constant 12 : index
    %8 = memref.load %arg1[%c12] : memref<56xf32, #tpu.memory_space<smem>>
    %c0_8 = arith.constant 0 : index
    %9 = memref.load %arg1[%c0_8] : memref<56xf32, #tpu.memory_space<smem>>
    %10 = vector.broadcast %9 : f32 to vector<8x128xf32>
    %11 = arith.mulf %10, %1 : vector<8x128xf32>
    %12 = vector.broadcast %8 : f32 to vector<8x128xf32>
    %13 = arith.addf %12, %11 : vector<8x128xf32>
    %c1_9 = arith.constant 1 : index
    %14 = memref.load %arg1[%c1_9] : memref<56xf32, #tpu.memory_space<smem>>
    %15 = vector.broadcast %14 : f32 to vector<8x128xf32>
    %16 = arith.mulf %15, %3 : vector<8x128xf32>
    %17 = arith.addf %13, %16 : vector<8x128xf32>
    %c2_10 = arith.constant 2 : index
    %18 = memref.load %arg1[%c2_10] : memref<56xf32, #tpu.memory_space<smem>>
    %19 = vector.broadcast %18 : f32 to vector<8x128xf32>
    %20 = arith.mulf %19, %5 : vector<8x128xf32>
    %21 = arith.addf %17, %20 : vector<8x128xf32>
    %c3_11 = arith.constant 3 : index
    %22 = memref.load %arg1[%c3_11] : memref<56xf32, #tpu.memory_space<smem>>
    %23 = vector.broadcast %22 : f32 to vector<8x128xf32>
    %24 = arith.mulf %23, %7 : vector<8x128xf32>
    %25 = arith.addf %21, %24 : vector<8x128xf32>
    %cst = arith.constant 0.000000e+00 : f32
    %26 = vector.broadcast %cst : f32 to vector<8x128xf32>
    %27 = arith.maximumf %25, %26 : vector<8x128xf32>
    %c13 = arith.constant 13 : index
    %28 = memref.load %arg1[%c13] : memref<56xf32, #tpu.memory_space<smem>>
    %c4 = arith.constant 4 : index
    %29 = memref.load %arg1[%c4] : memref<56xf32, #tpu.memory_space<smem>>
    %30 = vector.broadcast %29 : f32 to vector<8x128xf32>
    %31 = arith.mulf %30, %1 : vector<8x128xf32>
    %32 = vector.broadcast %28 : f32 to vector<8x128xf32>
    %33 = arith.addf %32, %31 : vector<8x128xf32>
    %c5 = arith.constant 5 : index
    %34 = memref.load %arg1[%c5] : memref<56xf32, #tpu.memory_space<smem>>
    %35 = vector.broadcast %34 : f32 to vector<8x128xf32>
    %36 = arith.mulf %35, %3 : vector<8x128xf32>
    %37 = arith.addf %33, %36 : vector<8x128xf32>
    %c6 = arith.constant 6 : index
    %38 = memref.load %arg1[%c6] : memref<56xf32, #tpu.memory_space<smem>>
    %39 = vector.broadcast %38 : f32 to vector<8x128xf32>
    %40 = arith.mulf %39, %5 : vector<8x128xf32>
    %41 = arith.addf %37, %40 : vector<8x128xf32>
    %c7 = arith.constant 7 : index
    %42 = memref.load %arg1[%c7] : memref<56xf32, #tpu.memory_space<smem>>
    %43 = vector.broadcast %42 : f32 to vector<8x128xf32>
    %44 = arith.mulf %43, %7 : vector<8x128xf32>
    %45 = arith.addf %41, %44 : vector<8x128xf32>
    %cst_12 = arith.constant 0.000000e+00 : f32
    %46 = vector.broadcast %cst_12 : f32 to vector<8x128xf32>
    %47 = arith.maximumf %45, %46 : vector<8x128xf32>
    %c14 = arith.constant 14 : index
    %48 = memref.load %arg1[%c14] : memref<56xf32, #tpu.memory_space<smem>>
    %c8 = arith.constant 8 : index
    %49 = memref.load %arg1[%c8] : memref<56xf32, #tpu.memory_space<smem>>
    %50 = vector.broadcast %49 : f32 to vector<8x128xf32>
    %51 = arith.mulf %50, %1 : vector<8x128xf32>
    %52 = vector.broadcast %48 : f32 to vector<8x128xf32>
    %53 = arith.addf %52, %51 : vector<8x128xf32>
    %c9 = arith.constant 9 : index
    %54 = memref.load %arg1[%c9] : memref<56xf32, #tpu.memory_space<smem>>
    %55 = vector.broadcast %54 : f32 to vector<8x128xf32>
    %56 = arith.mulf %55, %3 : vector<8x128xf32>
    %57 = arith.addf %53, %56 : vector<8x128xf32>
    %c10 = arith.constant 10 : index
    %58 = memref.load %arg1[%c10] : memref<56xf32, #tpu.memory_space<smem>>
    %59 = vector.broadcast %58 : f32 to vector<8x128xf32>
    %60 = arith.mulf %59, %5 : vector<8x128xf32>
    %61 = arith.addf %57, %60 : vector<8x128xf32>
    %c11 = arith.constant 11 : index
    %62 = memref.load %arg1[%c11] : memref<56xf32, #tpu.memory_space<smem>>
    %63 = vector.broadcast %62 : f32 to vector<8x128xf32>
    %64 = arith.mulf %63, %7 : vector<8x128xf32>
    %65 = arith.addf %61, %64 : vector<8x128xf32>
    %cst_13 = arith.constant 0.000000e+00 : f32
    %66 = vector.broadcast %cst_13 : f32 to vector<8x128xf32>
    %67 = arith.maximumf %65, %66 : vector<8x128xf32>
    %c39 = arith.constant 39 : index
    %68 = memref.load %arg1[%c39] : memref<56xf32, #tpu.memory_space<smem>>
    %c15 = arith.constant 15 : index
    %69 = memref.load %arg1[%c15] : memref<56xf32, #tpu.memory_space<smem>>
    %70 = vector.broadcast %69 : f32 to vector<8x128xf32>
    %71 = arith.mulf %70, %27 : vector<8x128xf32>
    %72 = vector.broadcast %68 : f32 to vector<8x128xf32>
    %73 = arith.addf %72, %71 : vector<8x128xf32>
    %c16 = arith.constant 16 : index
    %74 = memref.load %arg1[%c16] : memref<56xf32, #tpu.memory_space<smem>>
    %75 = vector.broadcast %74 : f32 to vector<8x128xf32>
    %76 = arith.mulf %75, %47 : vector<8x128xf32>
    %77 = arith.addf %73, %76 : vector<8x128xf32>
    %c17 = arith.constant 17 : index
    %78 = memref.load %arg1[%c17] : memref<56xf32, #tpu.memory_space<smem>>
    %79 = vector.broadcast %78 : f32 to vector<8x128xf32>
    %80 = arith.mulf %79, %67 : vector<8x128xf32>
    %81 = arith.addf %77, %80 : vector<8x128xf32>
    %cst_14 = arith.constant 0.000000e+00 : f32
    %82 = vector.broadcast %cst_14 : f32 to vector<8x128xf32>
    %83 = arith.maximumf %81, %82 : vector<8x128xf32>
    %c40 = arith.constant 40 : index
    %84 = memref.load %arg1[%c40] : memref<56xf32, #tpu.memory_space<smem>>
    %c18 = arith.constant 18 : index
    %85 = memref.load %arg1[%c18] : memref<56xf32, #tpu.memory_space<smem>>
    %86 = vector.broadcast %85 : f32 to vector<8x128xf32>
    %87 = arith.mulf %86, %27 : vector<8x128xf32>
    %88 = vector.broadcast %84 : f32 to vector<8x128xf32>
    %89 = arith.addf %88, %87 : vector<8x128xf32>
    %c19 = arith.constant 19 : index
    %90 = memref.load %arg1[%c19] : memref<56xf32, #tpu.memory_space<smem>>
    %91 = vector.broadcast %90 : f32 to vector<8x128xf32>
    %92 = arith.mulf %91, %47 : vector<8x128xf32>
    %93 = arith.addf %89, %92 : vector<8x128xf32>
    %c20 = arith.constant 20 : index
    %94 = memref.load %arg1[%c20] : memref<56xf32, #tpu.memory_space<smem>>
    %95 = vector.broadcast %94 : f32 to vector<8x128xf32>
    %96 = arith.mulf %95, %67 : vector<8x128xf32>
    %97 = arith.addf %93, %96 : vector<8x128xf32>
    %cst_15 = arith.constant 0.000000e+00 : f32
    %98 = vector.broadcast %cst_15 : f32 to vector<8x128xf32>
    %99 = arith.maximumf %97, %98 : vector<8x128xf32>
    %c41 = arith.constant 41 : index
    %100 = memref.load %arg1[%c41] : memref<56xf32, #tpu.memory_space<smem>>
    %c21 = arith.constant 21 : index
    %101 = memref.load %arg1[%c21] : memref<56xf32, #tpu.memory_space<smem>>
    %102 = vector.broadcast %101 : f32 to vector<8x128xf32>
    %103 = arith.mulf %102, %27 : vector<8x128xf32>
    %104 = vector.broadcast %100 : f32 to vector<8x128xf32>
    %105 = arith.addf %104, %103 : vector<8x128xf32>
    %c22 = arith.constant 22 : index
    %106 = memref.load %arg1[%c22] : memref<56xf32, #tpu.memory_space<smem>>
    %107 = vector.broadcast %106 : f32 to vector<8x128xf32>
    %108 = arith.mulf %107, %47 : vector<8x128xf32>
    %109 = arith.addf %105, %108 : vector<8x128xf32>
    %c23 = arith.constant 23 : index
    %110 = memref.load %arg1[%c23] : memref<56xf32, #tpu.memory_space<smem>>
    %111 = vector.broadcast %110 : f32 to vector<8x128xf32>
    %112 = arith.mulf %111, %67 : vector<8x128xf32>
    %113 = arith.addf %109, %112 : vector<8x128xf32>
    %cst_16 = arith.constant 0.000000e+00 : f32
    %114 = vector.broadcast %cst_16 : f32 to vector<8x128xf32>
    %115 = arith.maximumf %113, %114 : vector<8x128xf32>
    %c42 = arith.constant 42 : index
    %116 = memref.load %arg1[%c42] : memref<56xf32, #tpu.memory_space<smem>>
    %c24 = arith.constant 24 : index
    %117 = memref.load %arg1[%c24] : memref<56xf32, #tpu.memory_space<smem>>
    %118 = vector.broadcast %117 : f32 to vector<8x128xf32>
    %119 = arith.mulf %118, %27 : vector<8x128xf32>
    %120 = vector.broadcast %116 : f32 to vector<8x128xf32>
    %121 = arith.addf %120, %119 : vector<8x128xf32>
    %c25 = arith.constant 25 : index
    %122 = memref.load %arg1[%c25] : memref<56xf32, #tpu.memory_space<smem>>
    %123 = vector.broadcast %122 : f32 to vector<8x128xf32>
    %124 = arith.mulf %123, %47 : vector<8x128xf32>
    %125 = arith.addf %121, %124 : vector<8x128xf32>
    %c26 = arith.constant 26 : index
    %126 = memref.load %arg1[%c26] : memref<56xf32, #tpu.memory_space<smem>>
    %127 = vector.broadcast %126 : f32 to vector<8x128xf32>
    %128 = arith.mulf %127, %67 : vector<8x128xf32>
    %129 = arith.addf %125, %128 : vector<8x128xf32>
    %cst_17 = arith.constant 0.000000e+00 : f32
    %130 = vector.broadcast %cst_17 : f32 to vector<8x128xf32>
    %131 = arith.maximumf %129, %130 : vector<8x128xf32>
    %c43 = arith.constant 43 : index
    %132 = memref.load %arg1[%c43] : memref<56xf32, #tpu.memory_space<smem>>
    %c27 = arith.constant 27 : index
    %133 = memref.load %arg1[%c27] : memref<56xf32, #tpu.memory_space<smem>>
    %134 = vector.broadcast %133 : f32 to vector<8x128xf32>
    %135 = arith.mulf %134, %27 : vector<8x128xf32>
    %136 = vector.broadcast %132 : f32 to vector<8x128xf32>
    %137 = arith.addf %136, %135 : vector<8x128xf32>
    %c28 = arith.constant 28 : index
    %138 = memref.load %arg1[%c28] : memref<56xf32, #tpu.memory_space<smem>>
    %139 = vector.broadcast %138 : f32 to vector<8x128xf32>
    %140 = arith.mulf %139, %47 : vector<8x128xf32>
    %141 = arith.addf %137, %140 : vector<8x128xf32>
    %c29 = arith.constant 29 : index
    %142 = memref.load %arg1[%c29] : memref<56xf32, #tpu.memory_space<smem>>
    %143 = vector.broadcast %142 : f32 to vector<8x128xf32>
    %144 = arith.mulf %143, %67 : vector<8x128xf32>
    %145 = arith.addf %141, %144 : vector<8x128xf32>
    %cst_18 = arith.constant 0.000000e+00 : f32
    %146 = vector.broadcast %cst_18 : f32 to vector<8x128xf32>
    %147 = arith.maximumf %145, %146 : vector<8x128xf32>
    %c44 = arith.constant 44 : index
    %148 = memref.load %arg1[%c44] : memref<56xf32, #tpu.memory_space<smem>>
    %c30 = arith.constant 30 : index
    %149 = memref.load %arg1[%c30] : memref<56xf32, #tpu.memory_space<smem>>
    %150 = vector.broadcast %149 : f32 to vector<8x128xf32>
    %151 = arith.mulf %150, %27 : vector<8x128xf32>
    %152 = vector.broadcast %148 : f32 to vector<8x128xf32>
    %153 = arith.addf %152, %151 : vector<8x128xf32>
    %c31 = arith.constant 31 : index
    %154 = memref.load %arg1[%c31] : memref<56xf32, #tpu.memory_space<smem>>
    %155 = vector.broadcast %154 : f32 to vector<8x128xf32>
    %156 = arith.mulf %155, %47 : vector<8x128xf32>
    %157 = arith.addf %153, %156 : vector<8x128xf32>
    %c32 = arith.constant 32 : index
    %158 = memref.load %arg1[%c32] : memref<56xf32, #tpu.memory_space<smem>>
    %159 = vector.broadcast %158 : f32 to vector<8x128xf32>
    %160 = arith.mulf %159, %67 : vector<8x128xf32>
    %161 = arith.addf %157, %160 : vector<8x128xf32>
    %cst_19 = arith.constant 0.000000e+00 : f32
    %162 = vector.broadcast %cst_19 : f32 to vector<8x128xf32>
    %163 = arith.maximumf %161, %162 : vector<8x128xf32>
    %c45 = arith.constant 45 : index
    %164 = memref.load %arg1[%c45] : memref<56xf32, #tpu.memory_space<smem>>
    %c33 = arith.constant 33 : index
    %165 = memref.load %arg1[%c33] : memref<56xf32, #tpu.memory_space<smem>>
    %166 = vector.broadcast %165 : f32 to vector<8x128xf32>
    %167 = arith.mulf %166, %27 : vector<8x128xf32>
    %168 = vector.broadcast %164 : f32 to vector<8x128xf32>
    %169 = arith.addf %168, %167 : vector<8x128xf32>
    %c34 = arith.constant 34 : index
    %170 = memref.load %arg1[%c34] : memref<56xf32, #tpu.memory_space<smem>>
    %171 = vector.broadcast %170 : f32 to vector<8x128xf32>
    %172 = arith.mulf %171, %47 : vector<8x128xf32>
    %173 = arith.addf %169, %172 : vector<8x128xf32>
    %c35 = arith.constant 35 : index
    %174 = memref.load %arg1[%c35] : memref<56xf32, #tpu.memory_space<smem>>
    %175 = vector.broadcast %174 : f32 to vector<8x128xf32>
    %176 = arith.mulf %175, %67 : vector<8x128xf32>
    %177 = arith.addf %173, %176 : vector<8x128xf32>
    %cst_20 = arith.constant 0.000000e+00 : f32
    %178 = vector.broadcast %cst_20 : f32 to vector<8x128xf32>
    %179 = arith.maximumf %177, %178 : vector<8x128xf32>
    %c46 = arith.constant 46 : index
    %180 = memref.load %arg1[%c46] : memref<56xf32, #tpu.memory_space<smem>>
    %c36 = arith.constant 36 : index
    %181 = memref.load %arg1[%c36] : memref<56xf32, #tpu.memory_space<smem>>
    %182 = vector.broadcast %181 : f32 to vector<8x128xf32>
    %183 = arith.mulf %182, %27 : vector<8x128xf32>
    %184 = vector.broadcast %180 : f32 to vector<8x128xf32>
    %185 = arith.addf %184, %183 : vector<8x128xf32>
    %c37 = arith.constant 37 : index
    %186 = memref.load %arg1[%c37] : memref<56xf32, #tpu.memory_space<smem>>
    %187 = vector.broadcast %186 : f32 to vector<8x128xf32>
    %188 = arith.mulf %187, %47 : vector<8x128xf32>
    %189 = arith.addf %185, %188 : vector<8x128xf32>
    %c38 = arith.constant 38 : index
    %190 = memref.load %arg1[%c38] : memref<56xf32, #tpu.memory_space<smem>>
    %191 = vector.broadcast %190 : f32 to vector<8x128xf32>
    %192 = arith.mulf %191, %67 : vector<8x128xf32>
    %193 = arith.addf %189, %192 : vector<8x128xf32>
    %cst_21 = arith.constant 0.000000e+00 : f32
    %194 = vector.broadcast %cst_21 : f32 to vector<8x128xf32>
    %195 = arith.maximumf %193, %194 : vector<8x128xf32>
    %c55 = arith.constant 55 : index
    %196 = memref.load %arg1[%c55] : memref<56xf32, #tpu.memory_space<smem>>
    %c47 = arith.constant 47 : index
    %197 = memref.load %arg1[%c47] : memref<56xf32, #tpu.memory_space<smem>>
    %198 = vector.broadcast %197 : f32 to vector<8x128xf32>
    %199 = arith.mulf %198, %83 : vector<8x128xf32>
    %200 = vector.broadcast %196 : f32 to vector<8x128xf32>
    %201 = arith.addf %200, %199 : vector<8x128xf32>
    %c48 = arith.constant 48 : index
    %202 = memref.load %arg1[%c48] : memref<56xf32, #tpu.memory_space<smem>>
    %203 = vector.broadcast %202 : f32 to vector<8x128xf32>
    %204 = arith.mulf %203, %99 : vector<8x128xf32>
    %205 = arith.addf %201, %204 : vector<8x128xf32>
    %c49 = arith.constant 49 : index
    %206 = memref.load %arg1[%c49] : memref<56xf32, #tpu.memory_space<smem>>
    %207 = vector.broadcast %206 : f32 to vector<8x128xf32>
    %208 = arith.mulf %207, %115 : vector<8x128xf32>
    %209 = arith.addf %205, %208 : vector<8x128xf32>
    %c50 = arith.constant 50 : index
    %210 = memref.load %arg1[%c50] : memref<56xf32, #tpu.memory_space<smem>>
    %211 = vector.broadcast %210 : f32 to vector<8x128xf32>
    %212 = arith.mulf %211, %131 : vector<8x128xf32>
    %213 = arith.addf %209, %212 : vector<8x128xf32>
    %c51 = arith.constant 51 : index
    %214 = memref.load %arg1[%c51] : memref<56xf32, #tpu.memory_space<smem>>
    %215 = vector.broadcast %214 : f32 to vector<8x128xf32>
    %216 = arith.mulf %215, %147 : vector<8x128xf32>
    %217 = arith.addf %213, %216 : vector<8x128xf32>
    %c52 = arith.constant 52 : index
    %218 = memref.load %arg1[%c52] : memref<56xf32, #tpu.memory_space<smem>>
    %219 = vector.broadcast %218 : f32 to vector<8x128xf32>
    %220 = arith.mulf %219, %163 : vector<8x128xf32>
    %221 = arith.addf %217, %220 : vector<8x128xf32>
    %c53 = arith.constant 53 : index
    %222 = memref.load %arg1[%c53] : memref<56xf32, #tpu.memory_space<smem>>
    %223 = vector.broadcast %222 : f32 to vector<8x128xf32>
    %224 = arith.mulf %223, %179 : vector<8x128xf32>
    %225 = arith.addf %221, %224 : vector<8x128xf32>
    %c54 = arith.constant 54 : index
    %226 = memref.load %arg1[%c54] : memref<56xf32, #tpu.memory_space<smem>>
    %227 = vector.broadcast %226 : f32 to vector<8x128xf32>
    %228 = arith.mulf %227, %195 : vector<8x128xf32>
    %229 = arith.addf %225, %228 : vector<8x128xf32>
    %c0_22 = arith.constant 0 : index
    %c0_23 = arith.constant 0 : index
    %230 = vector.load %arg3[%c0_22, %c0_23] : memref<8x128xf32, #tpu.memory_space<vmem>>, vector<8x128xf32>
    tpu.vector_store %arg3[%c0_22, %c0_23], %229 {strides = array<i32>} : memref<8x128xf32, #tpu.memory_space<vmem>>, vector<8x128xf32>,
    return
  }
  func.func @transform_0(%arg0: i32) -> i32 {
    %c0_i32 = arith.constant 0 : i32
    %c0_i32_0 = arith.constant 0 : i32
    return %c0_i32 : i32
  }
  func.func @transform_1(%arg0: i32) -> (i32, i32, i32) {
    %c0_i32 = arith.constant 0 : i32
    %c0_i32_0 = arith.constant 0 : i32
    %c0_i32_1 = arith.constant 0 : i32
    return %c0_i32, %arg0, %c0_i32_0 : i32, i32, i32
  }
  func.func @transform_2(%arg0: i32) -> (i32, i32) {
    %c0_i32 = arith.constant 0 : i32
    %c0_i32_0 = arith.constant 0 : i32
    return %arg0, %c0_i32 : i32, i32
  }
}

</mosaic_0001>

<llo_original>
// kernel: net_forward.1
$region0: #{net_forward.1}
  #allocation0 [shape = 'u32[]', space=smem, size = 0x4, offset = 0x4, fixed_abs, tag = 'smem constant byte address 0x4 - core index']
  #allocation1 [shape = 'u32[144,128]{1,0:T(1,128)}', space=vmem, size = 0x12000, scoped, tag = 'internal scratch']
  %s0 = inlined_call_operand.vmem [shape: f32[56], index: 0, kind: input, shape index: {}]
  %s1 = inlined_call_operand.vmem [shape: f32[4,16,128], index: 1, kind: input, shape index: {}]
  %s2 = inlined_call_operand.hbm [shape: f32[16,128], index: 2, kind: output, shape index: {}]
  %s3 = sld [smem:[#allocation0]]
  $region83: #{net_forward.1} parent=0
    _
  %s5 = ssub.s32 1, %s3
  %s6 = scalar_select 0, %s5, %s3
  $region1: #{net_forward.1} parent=0
    #allocation2 [shape = 'u8[512]{0}', space=smem, size = 0x200, scoped, tag = 'input window, operand 0, single buffered']
    #allocation3 [shape = 's32[2]{0}', space=sflag, size = 0x8, scoped, tag = 'scoped memory for net_forward.1']
    #allocation4 [shape = 's32[2]{0}', space=sflag, size = 0x8, scoped, tag = 'scoped memory for net_forward.1']
    #allocation5 [shape = 'u8[32768]{0}', space=vmem, size = 0x8000, scoped, tag = 'input window, operand 1']
    #allocation6 [shape = 'u8[8192]{0}', space=vmem, size = 0x2000, scoped, tag = 'output window, operand 0']
    %7 = vsyncpa [#allocation4], 0
    %8 = vsyncpa [#allocation3], 0
    %s9 = scalar_lea.sflag [#allocation3], 1
    %10 = vsyncpa %s9, 0
    loop: start=0, step=1, limit=4
    $region2: #{net_forward.1} parent=1 // loop_pre_header
      _
    $region3: #{net_forward.1} parent=1 // loop_header
      %s12 = sphi 0, %s16
      %p13 = scmp.ge.s32.totalorder %s12, 4
      %s20 = sphi 0, %s20
      %s22 = sphi 0, %s20
      %s23 = sphi 0, %s22
      %s37 = sphi 0, %s23
      %s43 = sphi 0, %s45
      %s46 = sphi 0, %s43
      %s47 = sphi 0, %s46
      %s63 = sphi 0, %s47
      %s69 = sphi 0, %s71
      %s72 = sphi 0, %s69
      %s73 = sphi 0, %s72
      %s89 = sphi 0, %s73
    $region4: #{net_forward.1} parent=1 // loop_header_branch
      %15 = sbr.rel (%p13) target = $region8
    $region5: #{net_forward.1} parent=1 // loop_body
      %s17 = ssub.s32 %s12, 1
      %s18 = ssub.s32 %s12, 2
      %s19 = sadd.s32 %s12, 1
      %s21 = sadd.s32 %s20, 1
      %p24 = scmp.eq.s32.totalorder %s12, 1
      %p25 = scmp.ne.s32.totalorder %s20, %s22
      %p26 = scmp.eq.s32.totalorder %s12, 0
      %p27 = por %p25, %p26
      %p28 = scmp.ne.s32.totalorder %s20, %s22
      %p29 = scmp.eq.s32.totalorder %s17, 1
      %p30 = por %p28, %p29
      %p31 = scmp.ne.s32.totalorder %s22, %s23
      %p32 = scmp.eq.s32.totalorder %s17, 0
      %p33 = por %p31, %p32
      %p34 = scmp.ne.s32.totalorder %s22, %s23
      %p35 = scmp.eq.s32.totalorder %s18, 1
      %p36 = por %p34, %p35
      %p38 = scmp.ne.s32.totalorder %s23, %s37
      %p39 = scmp.eq.s32.totalorder %s18, 0
      %p40 = por %p38, %p39
      %s41 = ssub.s32 %s12, %s19
      %p42 = scmp.eq.s32.totalorder %s41, 0
      %s44 = sadd.s32 %s43, 1
      %s45 = scalar_select %p42, %s43, %s44
      %p48 = pneg %p42
      %p49 = scmp.eq.s32.totalorder %s12, 1
      %p50 = por %p48, %p49
      %p51 = scmp.ne.s32.totalorder %s43, %s46
      %p52 = scmp.eq.s32.totalorder %s12, 0
      %p53 = por %p51, %p52
      %p54 = scmp.ne.s32.totalorder %s43, %s46
      %p55 = scmp.eq.s32.totalorder %s17, 1
      %p56 = por %p54, %p55
      %p57 = scmp.ne.s32.totalorder %s46, %s47
      %p58 = scmp.eq.s32.totalorder %s17, 0
      %p59 = por %p57, %p58
      %p60 = scmp.ne.s32.totalorder %s46, %s47
      %p61 = scmp.eq.s32.totalorder %s18, 1
      %p62 = por %p60, %p61
      %p64 = scmp.ne.s32.totalorder %s47, %s63
      %p65 = scmp.eq.s32.totalorder %s18, 0
      %p66 = por %p64, %p65
      %s67 = ssub.s32 %s12, %s19
      %p68 = scmp.eq.s32.totalorder %s67, 0
      %s70 = sadd.s32 %s69, 1
      %s71 = scalar_select %p68, %s69, %s70
      %p74 = pneg %p68
      %p75 = scmp.eq.s32.totalorder %s12, 1
      %p76 = por %p74, %p75
      %p77 = scmp.ne.s32.totalorder %s69, %s72
      %p78 = scmp.eq.s32.totalorder %s12, 0
      %p79 = por %p77, %p78
      %p80 = scmp.ne.s32.totalorder %s69, %s72
      %p81 = scmp.eq.s32.totalorder %s17, 1
      %p82 = por %p80, %p81
      %p83 = scmp.ne.s32.totalorder %s72, %s73
      %p84 = scmp.eq.s32.totalorder %s17, 0
      %p85 = por %p83, %p84
      %p86 = scmp.ne.s32.totalorder %s72, %s73
      %p87 = scmp.eq.s32.totalorder %s18, 1
      %p88 = por %p86, %p87
      %p90 = scmp.ne.s32.totalorder %s73, %s89
      %p91 = scmp.eq.s32.totalorder %s18, 0
      %p92 = por %p90, %p91
      %p93 = scmp.le.s32.totalorder 1, %s12
      %p94 = scmp.lt.s32.totalorder %s12, 3
      %p95 = pnand %p93, %p94
      %p96 = pneg %p95
      // Predicated region
      $region9: #{net_forward.1} parent=5 // pred_check
        _
      $region10: #{net_forward.1} parent=5 // pred_check_branch
        %98 = sbr.rel (%p95) target = $region12
      $region11: #{net_forward.1} parent=5 // pred_region
        %s99 = ssub.s32 %s12, 1
        // Predicated region
        $region13: #{net_forward.1} parent=11 // pred_check
          %p100 = pneg %p33
        $region14: #{net_forward.1} parent=11 // pred_check_branch
          %102 = sbr.rel (%p100) target = $region16
        $region15: #{net_forward.1} parent=11 // pred_region
          %s104 = ssub.s32 16, 16
          %105 = vsyncadd [#allocation4], %s104
          %s107 = sshll.u32 %s0, 4
          %s108 = int_to_ptr.vmem [resolvable:$true] %s107
          %110 = dma.vmem_to_smem %s108, 16, [#allocation2], [#allocation4]
        $region16: #{net_forward.1} parent=11 // pred_fallthru
          _
      $region12: #{net_forward.1} parent=5 // pred_fallthru
        _
      %p111 = scmp.lt.s32.totalorder %s12, 2
      // Predicated region
      $region17: #{net_forward.1} parent=5 // pred_check
        %p112 = pneg %p111
      $region18: #{net_forward.1} parent=5 // pred_check_branch
        %114 = sbr.rel (%p112) target = $region20
      $region19: #{net_forward.1} parent=5 // pred_region
        // Predicated region
        $region21: #{net_forward.1} parent=19 // pred_check
          %p115 = pneg %p53
        $region22: #{net_forward.1} parent=19 // pred_check_branch
          %117 = sbr.rel (%p115) target = $region24
        $region23: #{net_forward.1} parent=19 // pred_region
          %s118 = sand.u32 %s43, 1
          %s119 = sand.u32 %s43, 1
          %s120 = smul.addr %s119, 32
          %s121 = scalar_lea.vmem [#allocation5], %s120
          %s122 = smul.addr %s12, 8
          %s123 = scalar_lea.vmem %s1, %s122
          // Predicated region
          $region25: #{net_forward.1} parent=23 // pred_check
            _
          $region26: #{net_forward.1} parent=23 // pred_check_branch
            %125 = sbr.rel (0) target = $region28
          $region27: #{net_forward.1} parent=23 // pred_region
            // Predicated region
            $region29: #{net_forward.1} parent=27 // pred_check
              _
            $region30: #{net_forward.1} parent=27 // pred_check_branch
              %127 = sbr.rel (0) target = $region32
            $region31: #{net_forward.1} parent=27 // pred_region
              // Predicated region
              $region44: #{net_forward.1} parent=31 // pred_check
                _
              $region45: #{net_forward.1} parent=31 // pred_check_branch
                %148 = sbr.rel (0) target = $region47
              $region46: #{net_forward.1} parent=31 // pred_region
                loop: start=0, step=1, limit=1
                $region48: #{net_forward.1} parent=46 // loop_pre_header
                  _
                $region49: #{net_forward.1} parent=46 // loop_header
                  %s150 = sphi 0, %s154
                  %p151 = scmp.ge.s32.totalorder %s150, 1
                  %s155 = sphi %s123, %s123
                  %s156 = sphi %s121, %s121
                $region50: #{net_forward.1} parent=46 // loop_header_branch
                  %153 = sbr.rel (%p151) target = $region54
                $region51: #{net_forward.1} parent=46 // loop_body
                  %v157 = vld [vmem:[%s155] sm:$0xff]
                  %158 = vst [vmem:[%s156] sm:$0xff] %v157
                  %v159 = vld [vmem:[%s155 + $0x10] sm:$0xff]
                  %160 = vst [vmem:[%s156 + $0x8] sm:$0xff] %v159
                  %v161 = vld [vmem:[%s155 + $0x20] sm:$0xff]
                  %162 = vst [vmem:[%s156 + $0x10] sm:$0xff] %v161
                  %v163 = vld [vmem:[%s155 + $0x30] sm:$0xff]
                  %164 = vst [vmem:[%s156 + $0x18] sm:$0xff] %v163
                $region52: #{net_forward.1} parent=46 // loop_footer
                  %s154 = sadd.s32 1, %s150
                $region53: #{net_forward.1} parent=46 // loop_footer_branch
                  %149 = sbr.rel target = $region49
                $region54: #{net_forward.1} parent=46 // loop_exit
                  _
              $region47: #{net_forward.1} parent=31 // pred_fallthru
                _
              // Predicated region
              $region55: #{net_forward.1} parent=31 // pred_check
                _
              $region56: #{net_forward.1} parent=31 // pred_check_branch
                %166 = sbr.rel target = $region58
              $region57: #{net_forward.1} parent=31 // pred_region
                _
              $region58: #{net_forward.1} parent=31 // pred_fallthru
                _
            $region32: #{net_forward.1} parent=27 // pred_fallthru
              _
            // Predicated region
            $region33: #{net_forward.1} parent=27 // pred_check
              _
            $region34: #{net_forward.1} parent=27 // pred_check_branch
              %129 = sbr.rel target = $region36
            $region35: #{net_forward.1} parent=27 // pred_region
              loop: start=0, step=1, limit=1
              $region37: #{net_forward.1} parent=35 // loop_pre_header
                _
              $region38: #{net_forward.1} parent=35 // loop_header
                %s132 = sphi 0, %s136
                %p133 = scmp.ge.s32.totalorder %s132, 1
                %s137 = sphi %s123, %s123
                %s138 = sphi %s121, %s121
              $region39: #{net_forward.1} parent=35 // loop_header_branch
                %135 = sbr.rel (%p133) target = $region43
              $region40: #{net_forward.1} parent=35 // loop_body
                %v139 = vld [vmem:[%s137] sm:$0xff]
                %140 = vst [vmem:[%s138] sm:$0xff] %v139
                %v141 = vld [vmem:[%s137 + $0x10] sm:$0xff]
                %142 = vst [vmem:[%s138 + $0x8] sm:$0xff] %v141
                %v143 = vld [vmem:[%s137 + $0x20] sm:$0xff]
                %144 = vst [vmem:[%s138 + $0x10] sm:$0xff] %v143
                %v145 = vld [vmem:[%s137 + $0x30] sm:$0xff]
                %146 = vst [vmem:[%s138 + $0x18] sm:$0xff] %v145
              $region41: #{net_forward.1} parent=35 // loop_footer
                %s136 = sadd.s32 1, %s132
              $region42: #{net_forward.1} parent=35 // loop_footer_branch
                %131 = sbr.rel target = $region38
              $region43: #{net_forward.1} parent=35 // loop_exit
                _
            $region36: #{net_forward.1} parent=27 // pred_fallthru
              _
          $region28: #{net_forward.1} parent=23 // pred_fallthru
            _
          %167 = vnop
        $region24: #{net_forward.1} parent=19 // pred_fallthru
          _
      $region20: #{net_forward.1} parent=5 // pred_fallthru
        _
      %p168 = scmp.le.s32.totalorder 1, %s12
      %p169 = scmp.lt.s32.totalorder %s12, 3
      %p170 = pnand %p168, %p169
      %p171 = pneg %p170
      // Predicated region
      $region59: #{net_forward.1} parent=5 // pred_check
        _
      $region60: #{net_forward.1} parent=5 // pred_check_branch
        %173 = sbr.rel (%p170) target = $region62
      $region61: #{net_forward.1} parent=5 // pred_region
        %s174 = ssub.s32 %s12, 1
        // Predicated region
        $region63: #{net_forward.1} parent=61 // pred_check
          %p175 = pneg %p33
        $region64: #{net_forward.1} parent=61 // pred_check_branch
          %177 = sbr.rel (%p175) target = $region66
        $region65: #{net_forward.1} parent=61 // pred_region
          %178 = dma.done [#allocation4], 16
        $region66: #{net_forward.1} parent=61 // pred_fallthru
          _
        %s179 = sand.u32 %s46, 1
        %s180 = sand.u32 %s46, 1
        %s181 = smul.addr %s180, 32
        %s182 = scalar_lea.vmem [#allocation5], %s181
        // Predicated region
        $region67: #{net_forward.1} parent=61 // pred_check
          %p183 = pneg %p59
        $region68: #{net_forward.1} parent=61 // pred_check_branch
          %185 = sbr.rel (%p183) target = $region70
        $region69: #{net_forward.1} parent=61 // pred_region
          _
        $region70: #{net_forward.1} parent=61 // pred_fallthru
          _
        %186 = sfence
        %p187 = pneg %p33
        %p188 = pneg %p30
        %s189 = sand.u32 %s46, 1
        %s190 = sand.u32 %s46, 1
        %s191 = smul.addr %s190, 32
        %s192 = scalar_lea.vmem [#allocation5], %s191
        %p193 = pneg %p59
        %p194 = pneg %p56
        %p195 = pneg %p85
        %p196 = pneg %p82
        %s197 = sand.u32 %s72, 1
        %s198 = scalar_lea.sflag [#allocation3], %s197
        %s199 = sand.u32 %s72, 1
        %s200 = smul.addr %s199, 8
        %s201 = scalar_lea.vmem [#allocation6], %s200
        %v202 = vld [vmem:[%s182] sm:$0xff]
        %s203 = scalar_lea.vmem %s182, 8 [#allocation5]
        %v204 = vld [vmem:[%s203] sm:$0xff]
        %s205 = scalar_lea.vmem %s182, 16 [#allocation5]
        %v206 = vld [vmem:[%s205] sm:$0xff]
        %s207 = scalar_lea.vmem %s182, 24 [#allocation5]
        %v208 = vld [vmem:[%s207] sm:$0xff]
        %s209 = sld [smem:[#allocation2 + $0xc]]
        %s210 = sld [smem:[#allocation2]]
        %v211 = vstv %s210
        %v212 = vmul.f32 %v211, %v202
        %v213 = vstv %s209
        %v214 = vadd.f32 %v213, %v212
        %s215 = sld [smem:[#allocation2 + $0x1]]
        %v216 = vstv %s215
        %v217 = vmul.f32 %v216, %v204
        %v218 = vadd.f32 %v214, %v217
        %s219 = sld [smem:[#allocation2 + $0x2]]
        %v220 = vstv %s219
        %v221 = vmul.f32 %v220, %v206
        %v222 = vadd.f32 %v218, %v221
        %s223 = sld [smem:[#allocation2 + $0x3]]
        %v224 = vstv %s223
        %v225 = vmul.f32 %v224, %v208
        %v226 = vadd.f32 %v222, %v225
        %v227 = vmax.f32 %v226, 0.0
        %s228 = sld [smem:[#allocation2 + $0xd]]
        %s229 = sld [smem:[#allocation2 + $0x4]]
        %v230 = vstv %s229
        %v231 = vmul.f32 %v230, %v202
        %v232 = vstv %s228
        %v233 = vadd.f32 %v232, %v231
        %s234 = sld [smem:[#allocation2 + $0x5]]
        %v235 = vstv %s234
        %v236 = vmul.f32 %v235, %v204
        %v237 = vadd.f32 %v233, %v236
        %s238 = sld [smem:[#allocation2 + $0x6]]
        %v239 = vstv %s238
        %v240 = vmul.f32 %v239, %v206
        %v241 = vadd.f32 %v237, %v240
        %s242 = sld [smem:[#allocation2 + $0x7]]
        %v243 = vstv %s242
        %v244 = vmul.f32 %v243, %v208
        %v245 = vadd.f32 %v241, %v244
        %v246 = vmax.f32 %v245, 0.0
        %s247 = sld [smem:[#allocation2 + $0xe]]
        %s248 = sld [smem:[#allocation2 + $0x8]]
        %v249 = vstv %s248
        %v250 = vmul.f32 %v249, %v202
        %v251 = vstv %s247
        %v252 = vadd.f32 %v251, %v250
        %s253 = sld [smem:[#allocation2 + $0x9]]
        %v254 = vstv %s253
        %v255 = vmul.f32 %v254, %v204
        %v256 = vadd.f32 %v252, %v255
        %s257 = sld [smem:[#allocation2 + $0xa]]
        %v258 = vstv %s257
        %v259 = vmul.f32 %v258, %v206
        %v260 = vadd.f32 %v256, %v259
        %s261 = sld [smem:[#allocation2 + $0xb]]
        %v262 = vstv %s261
        %v263 = vmul.f32 %v262, %v208
        %v264 = vadd.f32 %v260, %v263
        %v265 = vmax.f32 %v264, 0.0
        %s266 = sld [smem:[#allocation2 + $0x27]]
        %s267 = sld [smem:[#allocation2 + $0xf]]
        %v268 = vstv %s267
        %v269 = vmul.f32 %v268, %v227
        %v270 = vstv %s266
        %v271 = vadd.f32 %v270, %v269
        %s272 = sld [smem:[#allocation2 + $0x10]]
        %v273 = vstv %s272
        %v274 = vmul.f32 %v273, %v246
        %v275 = vadd.f32 %v271, %v274
        %s276 = sld [smem:[#allocation2 + $0x11]]
        %v277 = vstv %s276
        %v278 = vmul.f32 %v277, %v265
        %v279 = vadd.f32 %v275, %v278
        %v280 = vmax.f32 %v279, 0.0
        %s281 = sld [smem:[#allocation2 + $0x28]]
        %s282 = sld [smem:[#allocation2 + $0x12]]
        %v283 = vstv %s282
        %v284 = vmul.f32 %v283, %v227
        %v285 = vstv %s281
        %v286 = vadd.f32 %v285, %v284
        %s287 = sld [smem:[#allocation2 + $0x13]]
        %v288 = vstv %s287
        %v289 = vmul.f32 %v288, %v246
        %v290 = vadd.f32 %v286, %v289
        %s291 = sld [smem:[#allocation2 + $0x14]]
        %v292 = vstv %s291
        %v293 = vmul.f32 %v292, %v265
        %v294 = vadd.f32 %v290, %v293
        %v295 = vmax.f32 %v294, 0.0
        %s296 = sld [smem:[#allocation2 + $0x29]]
        %s297 = sld [smem:[#allocation2 + $0x15]]
        %v298 = vstv %s297
        %v299 = vmul.f32 %v298, %v227
        %v300 = vstv %s296
        %v301 = vadd.f32 %v300, %v299
        %s302 = sld [smem:[#allocation2 + $0x16]]
        %v303 = vstv %s302
        %v304 = vmul.f32 %v303, %v246
        %v305 = vadd.f32 %v301, %v304
        %s306 = sld [smem:[#allocation2 + $0x17]]
        %v307 = vstv %s306
        %v308 = vmul.f32 %v307, %v265
        %v309 = vadd.f32 %v305, %v308
        %v310 = vmax.f32 %v309, 0.0
        %s311 = sld [smem:[#allocation2 + $0x2a]]
        %s312 = sld [smem:[#allocation2 + $0x18]]
        %v313 = vstv %s312
        %v314 = vmul.f32 %v313, %v227
        %v315 = vstv %s311
        %v316 = vadd.f32 %v315, %v314
        %s317 = sld [smem:[#allocation2 + $0x19]]
        %v318 = vstv %s317
        %v319 = vmul.f32 %v318, %v246
        %v320 = vadd.f32 %v316, %v319
        %s321 = sld [smem:[#allocation2 + $0x1a]]
        %v322 = vstv %s321
        %v323 = vmul.f32 %v322, %v265
        %v324 = vadd.f32 %v320, %v323
        %v325 = vmax.f32 %v324, 0.0
        %s326 = sld [smem:[#allocation2 + $0x2b]]
        %s327 = sld [smem:[#allocation2 + $0x1b]]
        %v328 = vstv %s327
        %v329 = vmul.f32 %v328, %v227
        %v330 = vstv %s326
        %v331 = vadd.f32 %v330, %v329
        %s332 = sld [smem:[#allocation2 + $0x1c]]
        %v333 = vstv %s332
        %v334 = vmul.f32 %v333, %v246
        %v335 = vadd.f32 %v331, %v334
        %s336 = sld [smem:[#allocation2 + $0x1d]]
        %v337 = vstv %s336
        %v338 = vmul.f32 %v337, %v265
        %v339 = vadd.f32 %v335, %v338
        %v340 = vmax.f32 %v339, 0.0
        %s341 = sld [smem:[#allocation2 + $0x2c]]
        %s342 = sld [smem:[#allocation2 + $0x1e]]
        %v343 = vstv %s342
        %v344 = vmul.f32 %v343, %v227
        %v345 = vstv %s341
        %v346 = vadd.f32 %v345, %v344
        %s347 = sld [smem:[#allocation2 + $0x1f]]
        %v348 = vstv %s347
        %v349 = vmul.f32 %v348, %v246
        %v350 = vadd.f32 %v346, %v349
        %s351 = sld [smem:[#allocation2 + $0x20]]
        %v352 = vstv %s351
        %v353 = vmul.f32 %v352, %v265
        %v354 = vadd.f32 %v350, %v353
        %v355 = vmax.f32 %v354, 0.0
        %s356 = sld [smem:[#allocation2 + $0x2d]]
        %s357 = sld [smem:[#allocation2 + $0x21]]
        %v358 = vstv %s357
        %v359 = vmul.f32 %v358, %v227
        %v360 = vstv %s356
        %v361 = vadd.f32 %v360, %v359
        %s362 = sld [smem:[#allocation2 + $0x22]]
        %v363 = vstv %s362
        %v364 = vmul.f32 %v363, %v246
        %v365 = vadd.f32 %v361, %v364
        %s366 = sld [smem:[#allocation2 + $0x23]]
        %v367 = vstv %s366
        %v368 = vmul.f32 %v367, %v265
        %v369 = vadd.f32 %v365, %v368
        %v370 = vmax.f32 %v369, 0.0
        %s371 = sld [smem:[#allocation2 + $0x2e]]
        %s372 = sld [smem:[#allocation2 + $0x24]]
        %v373 = vstv %s372
        %v374 = vmul.f32 %v373, %v227
        %v375 = vstv %s371
        %v376 = vadd.f32 %v375, %v374
        %s377 = sld [smem:[#allocation2 + $0x25]]
        %v378 = vstv %s377
        %v379 = vmul.f32 %v378, %v246
        %v380 = vadd.f32 %v376, %v379
        %s381 = sld [smem:[#allocation2 + $0x26]]
        %v382 = vstv %s381
        %v383 = vmul.f32 %v382, %v265
        %v384 = vadd.f32 %v380, %v383
        %v385 = vmax.f32 %v384, 0.0
        %s386 = sld [smem:[#allocation2 + $0x37]]
        %s387 = sld [smem:[#allocation2 + $0x2f]]
        %v388 = vstv %s387
        %v389 = vmul.f32 %v388, %v280
        %v390 = vstv %s386
        %v391 = vadd.f32 %v390, %v389
        %s392 = sld [smem:[#allocation2 + $0x30]]
        %v393 = vstv %s392
        %v394 = vmul.f32 %v393, %v295
        %v395 = vadd.f32 %v391, %v394
        %s396 = sld [smem:[#allocation2 + $0x31]]
        %v397 = vstv %s396
        %v398 = vmul.f32 %v397, %v310
        %v399 = vadd.f32 %v395, %v398
        %s400 = sld [smem:[#allocation2 + $0x32]]
        %v401 = vstv %s400
        %v402 = vmul.f32 %v401, %v325
        %v403 = vadd.f32 %v399, %v402
        %s404 = sld [smem:[#allocation2 + $0x33]]
        %v405 = vstv %s404
        %v406 = vmul.f32 %v405, %v340
        %v407 = vadd.f32 %v403, %v406
        %s408 = sld [smem:[#allocation2 + $0x34]]
        %v409 = vstv %s408
        %v410 = vmul.f32 %v409, %v355
        %v411 = vadd.f32 %v407, %v410
        %s412 = sld [smem:[#allocation2 + $0x35]]
        %v413 = vstv %s412
        %v414 = vmul.f32 %v413, %v370
        %v415 = vadd.f32 %v411, %v414
        %s416 = sld [smem:[#allocation2 + $0x36]]
        %v417 = vstv %s416
        %v418 = vmul.f32 %v417, %v385
        %v419 = vadd.f32 %v415, %v418
        %420 = vst [vmem:[%s201] sm:$0xff] %v419
        %s421 = sand.u32 %s72, 1
        %s422 = scalar_lea.sflag [#allocation3], %s421
        %s423 = sand.u32 %s72, 1
        %s424 = smul.addr %s423, 8
        %s425 = scalar_lea.vmem [#allocation6], %s424
        // Predicated region
        $region71: #{net_forward.1} parent=61 // pred_check
          %p426 = pneg %p82
        $region72: #{net_forward.1} parent=61 // pred_check_branch
          %428 = sbr.rel (%p426) target = $region74
        $region73: #{net_forward.1} parent=61 // pred_region
          %s430 = ssub.s32 128, 128
          %431 = vsyncadd %s422, %s430
          %s432 = smul.addr %s17, 128
          %s433 = scalar_lea.hbm %s2, %s432
          %s435 = sshll.u32 %s425, 4
          %s436 = int_to_ptr.vmem [resolvable:$true] %s435
          %438 = dma.vmem_to_hbm [thread:$0]  %s436, 128, %s433, %s422
        $region74: #{net_forward.1} parent=61 // pred_fallthru
          _
      $region62: #{net_forward.1} parent=5 // pred_fallthru
        _
      %p439 = scmp.le.s32.totalorder 2, %s12
      // Predicated region
      $region75: #{net_forward.1} parent=5 // pred_check
        %p440 = pneg %p439
      $region76: #{net_forward.1} parent=5 // pred_check_branch
        %442 = sbr.rel (%p440) target = $region78
      $region77: #{net_forward.1} parent=5 // pred_region
        %s443 = ssub.s32 %s12, 2
        // Predicated region
        $region79: #{net_forward.1} parent=77 // pred_check
          %p444 = pneg %p88
        $region80: #{net_forward.1} parent=77 // pred_check_branch
          %446 = sbr.rel (%p444) target = $region82
        $region81: #{net_forward.1} parent=77 // pred_region
          %s447 = sand.u32 %s73, 1
          %s448 = scalar_lea.sflag [#allocation3], %s447
          %s449 = sand.u32 %s73, 1
          %s450 = smul.addr %s449, 8
          %s451 = scalar_lea.vmem [#allocation6], %s450
          %452 = dma.done %s448, 128
        $region82: #{net_forward.1} parent=77 // pred_fallthru
          _
      $region78: #{net_forward.1} parent=5 // pred_fallthru
        _
    $region6: #{net_forward.1} parent=1 // loop_footer
      %s16 = sadd.s32 1, %s12
    $region7: #{net_forward.1} parent=1 // loop_footer_branch
      %11 = sbr.rel target = $region3
    $region8: #{net_forward.1} parent=1 // loop_exit
      _
    %453 = vsyncpa [#allocation3], 1
    %s454 = scalar_lea.sflag [#allocation3], 1
    %455 = vsyncpa %s454, 1
    %456 = vsyncpa [#allocation4], 1
    %s457 = scalar_lea.sflag [#allocation4], 1
    %458 = vsyncpa %s457, 1

</llo_original>
